<compile_context>
chip_gen: v7x
topology: tpu7x:2x2x1
jax: 0.10.0
libtpu: 0.0.40
codegen_flags: <defaults>
</compile_context>

<pallas_src>
import functools

import jax
import jax.numpy as jnp
from jax.experimental import pallas as pl
from jax.experimental.pallas import tpu as pltpu


def _round_up(x, m):
    return ((x + m - 1) // m) * m


def _round_down(x, m):
    return (x // m) * m


_NUM_CORE_SPLITS = 2                     # covers v7x (2 TCs); harmless on v5e/v6e
_MAX_ELEMS = 2 ** 31 - 2 ** 27           # int32 flat-index headroom


# ----------------------------------------------------------------------------
# Kernel: stream tiles, binarize, accumulate three partial sums per core
# ----------------------------------------------------------------------------
def _fbeta_partial_kernel(x_ref, t_ref, o_ref, inter_acc, pred_acc, tgt_acc, *,
                          threshold, n_valid, tile_rows, lanes, tiles_per_core):
    c = pl.program_id(0)          # core-split axis ("parallel")
    i = pl.program_id(1)          # streaming reduction axis ("arbitrary")

    @pl.when(i == 0)
    def _():
        inter_acc[...] = jnp.zeros_like(inter_acc)
        pred_acc[...] = jnp.zeros_like(pred_acc)
        tgt_acc[...] = jnp.zeros_like(tgt_acc)

    x = x_ref[...]
    if jnp.issubdtype(x.dtype, jnp.floating):
        thr = jnp.asarray(threshold, x.dtype)     # compare in native dtype (torch does too)
    else:
        x = x.astype(jnp.float32)
        thr = jnp.float32(threshold)
    below = x < thr                                # NaN -> False -> counts as 1 (torch match)
    tf = t_ref[...].astype(jnp.float32)

    tile_elems = tile_rows * lanes
    tile_base = (c * tiles_per_core + i) * tile_elems   # flat offset of this logical tile

    def _accumulate(inter_c, pred_c, tgt_c):
        # Cheap sublane-direction partial sums into resident (1, C) accumulators;
        # the expensive cross-lane reduce runs exactly once at the last step.
        inter_acc[...] += jnp.sum(inter_c, axis=0, keepdims=True)
        pred_acc[...] += jnp.sum(pred_c, axis=0, keepdims=True)
        tgt_acc[...] += jnp.sum(tgt_c, axis=0, keepdims=True)

    full_tile = tile_base + tile_elems <= n_valid

    @pl.when(full_tile)
    def _():
        # Hot path: fully valid tile, fused binarize+intersection (no extra mul).
        _accumulate(jnp.where(below, 0.0, tf),
                    jnp.where(below, 0.0, 1.0),
                    tf)

    @pl.when(jnp.logical_not(full_tile))
    def _():
        # Tail / empty tile: mask by flat element index.  Masking uses where, not
        # multiply, so unspecified overhang data (possibly NaN) contributes 0.
        row = jax.lax.broadcasted_iota(jnp.int32, (tile_rows, lanes), 0)
        col = jax.lax.broadcasted_iota(jnp.int32, (tile_rows, lanes), 1)
        valid = (tile_base + row * lanes + col) < n_valid
        tf_m = jnp.where(valid, tf, 0.0)
        one_m = jnp.where(valid, 1.0, 0.0)
        _accumulate(jnp.where(below, 0.0, tf_m),
                    jnp.where(below, 0.0, one_m),
                    tf_m)

    @pl.when(i == pl.num_programs(1) - 1)
    def _():
        inter = jnp.sum(inter_acc[...])
        s_pred = jnp.sum(pred_acc[...])
        s_tgt = jnp.sum(tgt_acc[...])
        rowid = jax.lax.broadcasted_iota(jnp.int32, (8, 128), 0)
        o_ref[0] = jnp.where(rowid == 0, inter,
                   jnp.where(rowid == 1, s_pred,
                   jnp.where(rowid == 2, s_tgt, 0.0)))


# ----------------------------------------------------------------------------
# Wrapper
# ----------------------------------------------------------------------------
def fbeta_score(inputs, targets, *, beta=1.0, threshold=0.5, const=1e-7,
                block_byte_budget=8 * 1024 * 1024):
    x = jnp.asarray(inputs).reshape(-1)
    t = jnp.asarray(targets).reshape(-1)
    if x.shape != t.shape:
        raise ValueError(f"shape mismatch: {x.shape} vs {t.shape}")
    if t.dtype == jnp.bool_:
        t = t.astype(jnp.int8)    # avoid i1 blocks; still streams 1 B/elem
    n = x.shape[0]
    if n > _MAX_ELEMS:
        # TODO(synk): switch flat-index masking to int64 for > ~2e9 elements.
        raise NotImplementedError("input too large for int32 flat indexing")

    # Lane-dense 2-D view; the reshape is a free bitcast whenever C divides n.
    pad = 0
    for lanes in (512, 256, 128):
        if n % lanes == 0:
            break
    else:
        lanes = 128
        pad = _round_up(n, lanes) - n
        # TODO(synk): ragged n (not a multiple of 128) still takes one host pad
        # copy; masked in-kernel so the pad value is irrelevant.
        x = jnp.pad(x, (0, pad))
        t = jnp.pad(t, (0, pad))
    rows = (n + pad) // lanes
    x2 = x.reshape(rows, lanes)
    t2 = t.reshape(rows, lanes)

    # Tile sizing: ~block_byte_budget of input bytes per grid step (both operands),
    # double-buffered by the pipeline -> ~2x that in VMEM.
    bytes_per_row = lanes * (x2.dtype.itemsize + t2.dtype.itemsize)
    tile_rows = max(32, _round_down(block_byte_budget // bytes_per_row, 32))
    tile_rows = min(tile_rows, _round_up(rows, 32))
    n_tiles = pl.cdiv(rows, tile_rows)
    split = _NUM_CORE_SPLITS if n_tiles >= _NUM_CORE_SPLITS else 1
    tiles_per_core = pl.cdiv(n_tiles, split)

    kern = functools.partial(
        _fbeta_partial_kernel, threshold=float(threshold), n_valid=n,
        tile_rows=tile_rows, lanes=lanes, tiles_per_core=tiles_per_core)

    def in_map(c, i):
        # Clamp so a core's trailing (empty) logical tiles re-read the last valid
        # block; their contribution is zeroed by the in-kernel flat-index mask.
        return (jnp.minimum(c * tiles_per_core + i, n_tiles - 1), 0)

    parts = pl.pallas_call(
        kern,
        out_shape=jax.ShapeDtypeStruct((split, 8, 128), jnp.float32),
        grid_spec=pltpu.PrefetchScalarGridSpec(
            num_scalar_prefetch=0,
            grid=(split, tiles_per_core),
            in_specs=[
                pl.BlockSpec((tile_rows, lanes), in_map),
                pl.BlockSpec((tile_rows, lanes), in_map),
            ],
            out_specs=pl.BlockSpec((1, 8, 128), lambda c, i: (c, 0, 0)),
            scratch_shapes=[
                pltpu.VMEM((1, lanes), jnp.float32),   # intersection partials
                pltpu.VMEM((1, lanes), jnp.float32),   # sum(binarized inputs)
                pltpu.VMEM((1, lanes), jnp.float32),   # sum(targets)
            ],
        ),
        compiler_params=pltpu.CompilerParams(
            dimension_semantics=("parallel", "arbitrary"),
            vmem_limit_bytes=32 * 1024 * 1024),
        cost_estimate=pl.CostEstimate(
            flops=6 * rows * lanes,
            transcendentals=0,
            bytes_accessed=rows * bytes_per_row),
    )(x2, t2)

    # Tiny finalization in the wrapper (combines the per-core partial sums).
    inter = jnp.sum(parts[:, 0, 0])
    s_pred = jnp.sum(parts[:, 1, 0])
    s_tgt = jnp.sum(parts[:, 2, 0])
    b2 = float(beta) * float(beta)
    return (1.0 + b2) * inter / (s_pred + b2 * s_tgt + float(const))


class FBetaScore:
    """Pallas TPU port of the PyTorch FBetaScore module (beta=1 -> Dice)."""

    def __init__(self, beta: float = 1.0, threshold: float = 0.5):
        self.beta = float(beta)
        self.threshold = float(threshold)

    def __call__(self, inputs, targets, const=1e-07):
        return fbeta_score(inputs, targets, beta=self.beta,
                           threshold=self.threshold, const=float(const))


# ----------------------------------------------------------------------------
# Self-test
# ----------------------------------------------------------------------------
if __name__ == "__main__":
    key = jax.random.PRNGKey(0)
    k1, k2, k3, k4, k5, k6 = jax.random.split(key, 6)

    def fbeta_ref(inputs, targets, beta, threshold, const=1e-7):
        inputs = jnp.asarray(inputs).reshape(-1)
        if jnp.issubdtype(inputs.dtype, jnp.floating):
            thr = jnp.asarray(threshold, inputs.dtype)
        else:
            inputs = inputs.astype(jnp.float32)
            thr = jnp.float32(threshold)
        xb = jnp.where(inputs < thr, 0.0, 1.0)
        tf = jnp.asarray(targets).reshape(-1).astype(jnp.float32)
        inter = jnp.sum(xb * tf)
        return ((1.0 + beta ** 2) * inter
                / (jnp.sum(xb) + beta ** 2 * jnp.sum(tf) + const))

    def _rel_err(a, b):
        return abs(float(a) - float(b)) / max(1e-12, abs(float(b)))

    # 1) Small f32 case (single partially-masked tile), jitted through the class.
    inputs1 = jax.random.uniform(k1, (2, 4, 16, 16), jnp.float32)
    targets1 = (jax.random.uniform(k2, (2, 4, 16, 16), jnp.float32) > 0.5
                ).astype(jnp.float32)
    metric = FBetaScore(beta=1.0, threshold=0.5)
    out1 = jax.jit(metric)(inputs1, targets1)
    jax.block_until_ready(out1)
    assert out1.shape == (), out1.shape
    assert bool(jnp.isfinite(out1))
    assert _rel_err(out1, fbeta_ref(inputs1, targets1, 1.0, 0.5)) < 1e-5

    # 2) Mixed native dtypes (bf16 predictions, int8 targets), small tile budget
    #    to exercise the multi-tile grid, the 2-way core split and the clamped
    #    empty-tile path.
    inputs2 = jax.random.uniform(k3, (2, 3, 128, 128), jnp.float32
                                 ).astype(jnp.bfloat16)
    targets2 = (jax.random.uniform(k4, (2, 3, 128, 128), jnp.float32) > 0.7
                ).astype(jnp.int8)
    out2 = fbeta_score(inputs2, targets2, beta=2.0, threshold=0.3,
                       block_byte_budget=96 * 1024)
    jax.block_until_ready(out2)
    assert _rel_err(out2, fbeta_ref(inputs2, targets2, 2.0, 0.3)) < 1e-4

    # 3) Ragged element count (not a multiple of 128) -> pad-fallback path.
    inputs3 = jax.random.uniform(k5, (7, 5, 9, 11), jnp.float32)
    targets3 = (jax.random.uniform(k6, (7, 5, 9, 11), jnp.float32) > 0.4
                ).astype(jnp.float32)
    out3 = fbeta_score(inputs3, targets3, beta=0.5, threshold=0.6)
    jax.block_until_ready(out3)
    assert _rel_err(out3, fbeta_ref(inputs3, targets3, 0.5, 0.6)) < 1e-5

    print("KERNEL_OK")
</pallas_src>

<mosaic_0001>
module attributes {stable_mosaic.version = 11 : i64} {
  func.func @_fbeta_partial_kernel(%arg0: i32, %arg1: i32, %arg2: memref<32x512xf32, #tpu.memory_space<vmem>>, %arg3: memref<32x512xf32, #tpu.memory_space<vmem>>, %arg4: memref<1x8x128xf32, #tpu.memory_space<vmem>>, %arg5: memref<1x512xf32, #tpu.memory_space<vmem>>, %arg6: memref<1x512xf32, #tpu.memory_space<vmem>>, %arg7: memref<1x512xf32, #tpu.memory_space<vmem>>) attributes {dimension_semantics = [#tpu.dimension_semantics<parallel>, #tpu.dimension_semantics<arbitrary>], iteration_bounds = array<i64: 1, 1>, scalar_prefetch = 0 : i64, scratch_operands = 3 : i64, tpu.core_type = #tpu.core_type<tc>, window_params = [{transform_indices = @transform_0, window_bounds = array<i64: 32, 512>}, {transform_indices = @transform_1, window_bounds = array<i64: 32, 512>}, {transform_indices = @transform_2, window_bounds = array<i64: 1, 8, 128>}]} {
    %c0_i32 = arith.constant 0 : i32
    %0 = arith.cmpi eq, %arg1, %c0_i32 : i32
    %1 = arith.extui %0 : i1 to i32
    %c0_i32_0 = arith.constant 0 : i32
    %2 = arith.cmpi ne, %1, %c0_i32_0 : i32
    scf.if %2 {
      %cst_9 = arith.constant 0.000000e+00 : f32
      %20 = vector.broadcast %cst_9 : f32 to vector<1x512xf32>
      %c0_10 = arith.constant 0 : index
      %c0_11 = arith.constant 0 : index
      %21 = vector.load %arg5[%c0_10, %c0_11] : memref<1x512xf32, #tpu.memory_space<vmem>>, vector<1x512xf32>
      tpu.vector_store %arg5[%c0_10, %c0_11], %20 {strides = array<i32>} : memref<1x512xf32, #tpu.memory_space<vmem>>, vector<1x512xf32>,
      %cst_12 = arith.constant 0.000000e+00 : f32
      %22 = vector.broadcast %cst_12 : f32 to vector<1x512xf32>
      %c0_13 = arith.constant 0 : index
      %c0_14 = arith.constant 0 : index
      %23 = vector.load %arg6[%c0_13, %c0_14] : memref<1x512xf32, #tpu.memory_space<vmem>>, vector<1x512xf32>
      tpu.vector_store %arg6[%c0_13, %c0_14], %22 {strides = array<i32>} : memref<1x512xf32, #tpu.memory_space<vmem>>, vector<1x512xf32>,
      %cst_15 = arith.constant 0.000000e+00 : f32
      %24 = vector.broadcast %cst_15 : f32 to vector<1x512xf32>
      %c0_16 = arith.constant 0 : index
      %c0_17 = arith.constant 0 : index
      %25 = vector.load %arg7[%c0_16, %c0_17] : memref<1x512xf32, #tpu.memory_space<vmem>>, vector<1x512xf32>
      tpu.vector_store %arg7[%c0_16, %c0_17], %24 {strides = array<i32>} : memref<1x512xf32, #tpu.memory_space<vmem>>, vector<1x512xf32>,
    } else {
    }
    %c0 = arith.constant 0 : index
    %c0_1 = arith.constant 0 : index
    %3 = vector.load %arg2[%c0, %c0_1] : memref<32x512xf32, #tpu.memory_space<vmem>>, vector<32x512xf32>
    %cst = arith.constant 5.000000e-01 : f32
    %4 = vector.broadcast %cst : f32 to vector<32x512xf32>
    %5 = arith.cmpf olt, %3, %4 : vector<32x512xf32>
    %c0_2 = arith.constant 0 : index
    %c0_3 = arith.constant 0 : index
    %6 = vector.load %arg3[%c0_2, %c0_3] : memref<32x512xf32, #tpu.memory_space<vmem>>, vector<32x512xf32>
    %c1_i32 = arith.constant 1 : i32
    %7 = arith.muli %arg0, %c1_i32 : i32
    %8 = arith.addi %7, %arg1 : i32
    %c16384_i32 = arith.constant 16384 : i32
    %9 = arith.muli %8, %c16384_i32 : i32
    %c16384_i32_4 = arith.constant 16384 : i32
    %10 = arith.addi %9, %c16384_i32_4 : i32
    %c2048_i32 = arith.constant 2048 : i32
    %11 = arith.cmpi sle, %10, %c2048_i32 : i32
    %12 = arith.extui %11 : i1 to i32
    %c0_i32_5 = arith.constant 0 : i32
    %13 = arith.cmpi ne, %12, %c0_i32_5 : i32
    scf.if %13 {
      %cst_9 = arith.constant 0.000000e+00 : f32
      %20 = vector.broadcast %cst_9 : f32 to vector<32x512xf32>
      %21 = arith.select %5, %20, %6 : vector<32x512xi1>, vector<32x512xf32>
      %cst_10 = arith.constant 0.000000e+00 : f32
      %cst_11 = arith.constant 1.000000e+00 : f32
      %22 = vector.broadcast %cst_10 : f32 to vector<32x512xf32>
      %23 = vector.broadcast %cst_11 : f32 to vector<32x512xf32>
      %24 = arith.select %5, %22, %23 : vector<32x512xi1>, vector<32x512xf32>
      %c0_12 = arith.constant 0 : index
      %c0_13 = arith.constant 0 : index
      %25 = vector.load %arg5[%c0_12, %c0_13] : memref<1x512xf32, #tpu.memory_space<vmem>>, vector<1x512xf32>
      %cst_14 = arith.constant dense<0.000000e+00> : vector<512xf32>
      %26 = vector.multi_reduction <add>, %21, %cst_14 [0] : vector<32x512xf32> to vector<512xf32>
      %27 = vector.shape_cast %26 : vector<512xf32> to vector<1x512xf32>
      %28 = arith.addf %25, %27 : vector<1x512xf32>
      %c0_15 = arith.constant 0 : index
      %c0_16 = arith.constant 0 : index
      %29 = vector.load %arg5[%c0_15, %c0_16] : memref<1x512xf32, #tpu.memory_space<vmem>>, vector<1x512xf32>
      tpu.vector_store %arg5[%c0_15, %c0_16], %28 {strides = array<i32>} : memref<1x512xf32, #tpu.memory_space<vmem>>, vector<1x512xf32>,
      %c0_17 = arith.constant 0 : index
      %c0_18 = arith.constant 0 : index
      %30 = vector.load %arg6[%c0_17, %c0_18] : memref<1x512xf32, #tpu.memory_space<vmem>>, vector<1x512xf32>
      %cst_19 = arith.constant dense<0.000000e+00> : vector<512xf32>
      %31 = vector.multi_reduction <add>, %24, %cst_19 [0] : vector<32x512xf32> to vector<512xf32>
      %32 = vector.shape_cast %31 : vector<512xf32> to vector<1x512xf32>
      %33 = arith.addf %30, %32 : vector<1x512xf32>
      %c0_20 = arith.constant 0 : index
      %c0_21 = arith.constant 0 : index
      %34 = vector.load %arg6[%c0_20, %c0_21] : memref<1x512xf32, #tpu.memory_space<vmem>>, vector<1x512xf32>
      tpu.vector_store %arg6[%c0_20, %c0_21], %33 {strides = array<i32>} : memref<1x512xf32, #tpu.memory_space<vmem>>, vector<1x512xf32>,
      %c0_22 = arith.constant 0 : index
      %c0_23 = arith.constant 0 : index
      %35 = vector.load %arg7[%c0_22, %c0_23] : memref<1x512xf32, #tpu.memory_space<vmem>>, vector<1x512xf32>
      %cst_24 = arith.constant dense<0.000000e+00> : vector<512xf32>
      %36 = vector.multi_reduction <add>, %6, %cst_24 [0] : vector<32x512xf32> to vector<512xf32>
      %37 = vector.shape_cast %36 : vector<512xf32> to vector<1x512xf32>
      %38 = arith.addf %35, %37 : vector<1x512xf32>
      %c0_25 = arith.constant 0 : index
      %c0_26 = arith.constant 0 : index
      %39 = vector.load %arg7[%c0_25, %c0_26] : memref<1x512xf32, #tpu.memory_space<vmem>>, vector<1x512xf32>
      tpu.vector_store %arg7[%c0_25, %c0_26], %38 {strides = array<i32>} : memref<1x512xf32, #tpu.memory_space<vmem>>, vector<1x512xf32>,
    } else {
    }
    %true = arith.constant true
    %14 = arith.xori %11, %true : i1
    %15 = arith.extui %14 : i1 to i32
    %c0_i32_6 = arith.constant 0 : i32
    %16 = arith.cmpi ne, %15, %c0_i32_6 : i32
    scf.if %16 {
      %20 = tpu.iota {dimensions = array<i32: 0>} : vector<32x512xi32>
      %21 = tpu.iota {dimensions = array<i32: 1>} : vector<32x512xi32>
      %c512_i32 = arith.constant 512 : i32
      %22 = vector.broadcast %c512_i32 : i32 to vector<32x512xi32>
      %23 = arith.muli %20, %22 : vector<32x512xi32>
      %24 = vector.broadcast %9 : i32 to vector<32x512xi32>
      %25 = arith.addi %24, %23 : vector<32x512xi32>
      %26 = arith.addi %25, %21 : vector<32x512xi32>
      %c2048_i32_9 = arith.constant 2048 : i32
      %27 = vector.broadcast %c2048_i32_9 : i32 to vector<32x512xi32>
      %28 = arith.cmpi slt, %26, %27 : vector<32x512xi32>
      %cst_10 = arith.constant 0.000000e+00 : f32
      %29 = vector.broadcast %cst_10 : f32 to vector<32x512xf32>
      %30 = arith.select %28, %6, %29 : vector<32x512xi1>, vector<32x512xf32>
      %cst_11 = arith.constant 1.000000e+00 : f32
      %cst_12 = arith.constant 0.000000e+00 : f32
      %31 = vector.broadcast %cst_11 : f32 to vector<32x512xf32>
      %32 = vector.broadcast %cst_12 : f32 to vector<32x512xf32>
      %33 = arith.select %28, %31, %32 : vector<32x512xi1>, vector<32x512xf32>
      %cst_13 = arith.constant 0.000000e+00 : f32
      %34 = vector.broadcast %cst_13 : f32 to vector<32x512xf32>
      %35 = arith.select %5, %34, %30 : vector<32x512xi1>, vector<32x512xf32>
      %cst_14 = arith.constant 0.000000e+00 : f32
      %36 = vector.broadcast %cst_14 : f32 to vector<32x512xf32>
      %37 = arith.select %5, %36, %33 : vector<32x512xi1>, vector<32x512xf32>
      %c0_15 = arith.constant 0 : index
      %c0_16 = arith.constant 0 : index
      %38 = vector.load %arg5[%c0_15, %c0_16] : memref<1x512xf32, #tpu.memory_space<vmem>>, vector<1x512xf32>
      %cst_17 = arith.constant dense<0.000000e+00> : vector<512xf32>
      %39 = vector.multi_reduction <add>, %35, %cst_17 [0] : vector<32x512xf32> to vector<512xf32>
      %40 = vector.shape_cast %39 : vector<512xf32> to vector<1x512xf32>
      %41 = arith.addf %38, %40 : vector<1x512xf32>
      %c0_18 = arith.constant 0 : index
      %c0_19 = arith.constant 0 : index
      %42 = vector.load %arg5[%c0_18, %c0_19] : memref<1x512xf32, #tpu.memory_space<vmem>>, vector<1x512xf32>
      tpu.vector_store %arg5[%c0_18, %c0_19], %41 {strides = array<i32>} : memref<1x512xf32, #tpu.memory_space<vmem>>, vector<1x512xf32>,
      %c0_20 = arith.constant 0 : index
      %c0_21 = arith.constant 0 : index
      %43 = vector.load %arg6[%c0_20, %c0_21] : memref<1x512xf32, #tpu.memory_space<vmem>>, vector<1x512xf32>
      %cst_22 = arith.constant dense<0.000000e+00> : vector<512xf32>
      %44 = vector.multi_reduction <add>, %37, %cst_22 [0] : vector<32x512xf32> to vector<512xf32>
      %45 = vector.shape_cast %44 : vector<512xf32> to vector<1x512xf32>
      %46 = arith.addf %43, %45 : vector<1x512xf32>
      %c0_23 = arith.constant 0 : index
      %c0_24 = arith.constant 0 : index
      %47 = vector.load %arg6[%c0_23, %c0_24] : memref<1x512xf32, #tpu.memory_space<vmem>>, vector<1x512xf32>
      tpu.vector_store %arg6[%c0_23, %c0_24], %46 {strides = array<i32>} : memref<1x512xf32, #tpu.memory_space<vmem>>, vector<1x512xf32>,
      %c0_25 = arith.constant 0 : index
      %c0_26 = arith.constant 0 : index
      %48 = vector.load %arg7[%c0_25, %c0_26] : memref<1x512xf32, #tpu.memory_space<vmem>>, vector<1x512xf32>
      %cst_27 = arith.constant dense<0.000000e+00> : vector<512xf32>
      %49 = vector.multi_reduction <add>, %30, %cst_27 [0] : vector<32x512xf32> to vector<512xf32>
      %50 = vector.shape_cast %49 : vector<512xf32> to vector<1x512xf32>
      %51 = arith.addf %48, %50 : vector<1x512xf32>
      %c0_28 = arith.constant 0 : index
      %c0_29 = arith.constant 0 : index
      %52 = vector.load %arg7[%c0_28, %c0_29] : memref<1x512xf32, #tpu.memory_space<vmem>>, vector<1x512xf32>
      tpu.vector_store %arg7[%c0_28, %c0_29], %51 {strides = array<i32>} : memref<1x512xf32, #tpu.memory_space<vmem>>, vector<1x512xf32>,
    } else {
    }
    %c0_i32_7 = arith.constant 0 : i32
    %17 = arith.cmpi eq, %arg1, %c0_i32_7 : i32
    %18 = arith.extui %17 : i1 to i32
    %c0_i32_8 = arith.constant 0 : i32
    %19 = arith.cmpi ne, %18, %c0_i32_8 : i32
    scf.if %19 {
      %c0_9 = arith.constant 0 : index
      %c0_10 = arith.constant 0 : index
      %20 = vector.load %arg5[%c0_9, %c0_10] : memref<1x512xf32, #tpu.memory_space<vmem>>, vector<1x512xf32>
      %21 = vector.shape_cast %20 : vector<1x512xf32> to vector<1x1x512xf32>
      %cst_11 = arith.constant dense<0.000000e+00> : vector<1xf32>
      %22 = vector.multi_reduction <add>, %21, %cst_11 [1, 2] : vector<1x1x512xf32> to vector<1xf32>
      %23 = vector.shape_cast %22 : vector<1xf32> to vector<1x1x1xf32>
      %24 = vector.extract %23[0, 0, 0] : f32 from vector<1x1x1xf32>
      %c0_12 = arith.constant 0 : index
      %c0_13 = arith.constant 0 : index
      %25 = vector.load %arg6[%c0_12, %c0_13] : memref<1x512xf32, #tpu.memory_space<vmem>>, vector<1x512xf32>
      %26 = vector.shape_cast %25 : vector<1x512xf32> to vector<1x1x512xf32>
      %cst_14 = arith.constant dense<0.000000e+00> : vector<1xf32>
      %27 = vector.multi_reduction <add>, %26, %cst_14 [1, 2] : vector<1x1x512xf32> to vector<1xf32>
      %28 = vector.shape_cast %27 : vector<1xf32> to vector<1x1x1xf32>
      %29 = vector.extract %28[0, 0, 0] : f32 from vector<1x1x1xf32>
      %c0_15 = arith.constant 0 : index
      %c0_16 = arith.constant 0 : index
      %30 = vector.load %arg7[%c0_15, %c0_16] : memref<1x512xf32, #tpu.memory_space<vmem>>, vector<1x512xf32>
      %31 = vector.shape_cast %30 : vector<1x512xf32> to vector<1x1x512xf32>
      %cst_17 = arith.constant dense<0.000000e+00> : vector<1xf32>
      %32 = vector.multi_reduction <add>, %31, %cst_17 [1, 2] : vector<1x1x512xf32> to vector<1xf32>
      %33 = vector.shape_cast %32 : vector<1xf32> to vector<1x1x1xf32>
      %34 = vector.extract %33[0, 0, 0] : f32 from vector<1x1x1xf32>
      %35 = tpu.iota {dimensions = array<i32: 0>} : vector<8x128xi32>
      %c0_i32_18 = arith.constant 0 : i32
      %36 = vector.broadcast %c0_i32_18 : i32 to vector<8x128xi32>
      %37 = arith.cmpi eq, %35, %36 : vector<8x128xi32>
      %c1_i32_19 = arith.constant 1 : i32
      %38 = vector.broadcast %c1_i32_19 : i32 to vector<8x128xi32>
      %39 = arith.cmpi eq, %35, %38 : vector<8x128xi32>
      %c2_i32 = arith.constant 2 : i32
      %40 = vector.broadcast %c2_i32 : i32 to vector<8x128xi32>
      %41 = arith.cmpi eq, %35, %40 : vector<8x128xi32>
      %cst_20 = arith.constant 0.000000e+00 : f32
      %42 = vector.broadcast %34 : f32 to vector<8x128xf32>
      %43 = vector.broadcast %cst_20 : f32 to vector<8x128xf32>
      %44 = arith.select %41, %42, %43 : vector<8x128xi1>, vector<8x128xf32>
      %45 = vector.broadcast %29 : f32 to vector<8x128xf32>
      %46 = arith.select %39, %45, %44 : vector<8x128xi1>, vector<8x128xf32>
      %47 = vector.broadcast %24 : f32 to vector<8x128xf32>
      %48 = arith.select %37, %47, %46 : vector<8x128xi1>, vector<8x128xf32>
      %c0_21 = arith.constant 0 : index
      %c0_22 = arith.constant 0 : index
      %c0_23 = arith.constant 0 : index
      %49 = vector.load %arg4[%c0_21, %c0_22, %c0_23] : memref<1x8x128xf32, #tpu.memory_space<vmem>>, vector<1x8x128xf32>
      %50 = vector.shape_cast %49 : vector<1x8x128xf32> to vector<8x128xf32>
      %51 = vector.shape_cast %48 : vector<8x128xf32> to vector<1x8x128xf32>
      tpu.vector_store %arg4[%c0_21, %c0_22, %c0_23], %51 {strides = array<i32>} : memref<1x8x128xf32, #tpu.memory_space<vmem>>, vector<1x8x128xf32>,
    } else {
    }
    return
  }
  func.func @transform_0(%arg0: i32, %arg1: i32) -> (i32, i32) {
    %c1_i32 = arith.constant 1 : i32
    %0 = arith.muli %arg0, %c1_i32 : i32
    %1 = arith.addi %0, %arg1 : i32
    %c0_i32 = arith.constant 0 : i32
    %2 = arith.minsi %1, %c0_i32 : i32
    %c0_i32_0 = arith.constant 0 : i32
    %c0_i32_1 = arith.constant 0 : i32
    return %2, %c0_i32_0 : i32, i32
  }
  func.func @transform_1(%arg0: i32, %arg1: i32) -> (i32, i32) {
    %c1_i32 = arith.constant 1 : i32
    %0 = arith.muli %arg0, %c1_i32 : i32
    %1 = arith.addi %0, %arg1 : i32
    %c0_i32 = arith.constant 0 : i32
    %2 = arith.minsi %1, %c0_i32 : i32
    %c0_i32_0 = arith.constant 0 : i32
    %c0_i32_1 = arith.constant 0 : i32
    return %2, %c0_i32_0 : i32, i32
  }
  func.func @transform_2(%arg0: i32, %arg1: i32) -> (i32, i32, i32) {
    %c0_i32 = arith.constant 0 : i32
    %c0_i32_0 = arith.constant 0 : i32
    %c0_i32_1 = arith.constant 0 : i32
    return %arg0, %c0_i32, %c0_i32_0 : i32, i32, i32
  }
}

</mosaic_0001>

<llo_original>
// kernel: _unnamed_function_.1
$region0: #{_unnamed_function_.1}
  #allocation0 [shape = 'u32[]', space=smem, size = 0x4, offset = 0x4, fixed_abs, tag = 'smem constant byte address 0x4 - core index']
  #allocation1 [shape = 'u32[144,128]{1,0:T(1,128)}', space=vmem, size = 0x12000, scoped, tag = 'internal scratch']
  #allocation2 [shape = 'f32[1,512]{1,0:T(1,128)}', space=vmem, size = 0x800, scoped, tag = 'scratch operand']
  #allocation3 [shape = 'f32[1,512]{1,0:T(1,128)}', space=vmem, size = 0x800, scoped, tag = 'scratch operand']
  #allocation4 [shape = 'f32[1,512]{1,0:T(1,128)}', space=vmem, size = 0x800, scoped, tag = 'scratch operand']
  %s0 = inlined_call_operand.vmem [shape: f32[4,512], index: 0, kind: input, shape index: {}]
  %s1 = inlined_call_operand.vmem [shape: f32[4,512], index: 1, kind: input, shape index: {}]
  %s2 = inlined_call_operand.vmem [shape: f32[1,8,128], index: 2, kind: output, shape index: {}]
  %s3 = sld [smem:[#allocation0]]
  $region34: #{_unnamed_function_.1} parent=0
    _
  %s5 = ssub.s32 1, %s3
  %s6 = scalar_select 0, %s5, %s3
  // Predicated region
  $region2: #{_unnamed_function_.1} parent=0 // pred_check
    _
  $region3: #{_unnamed_function_.1} parent=0 // pred_check_branch
    %8 = sbr.rel (0) target = $region5
  $region4: #{_unnamed_function_.1} parent=0 // pred_region
    %s9 = sadd.s32 0, 0
    %p10 = scmp.lt.s32.totalorder %s9, 0
    %s11 = scalar_select %p10, %s9, 0
    %s12 = smul.u32 8, %s11
    %s13 = ssub.s32 1, %s12
    %s14 = smul.u32 64, %s13
    %s15 = smul.u32 %s14, 4
    %p16 = scmp.lt.s32.totalorder %s12, 0
    %s17 = scalar_select %p16, %s12, 0
    %s18 = smul.addr %s17, 4
    %s19 = smul.addr %s18, 4
    %s20 = scalar_lea.vmem %s0, %s19
    %s21 = sadd.s32 0, 0
    %p22 = scmp.lt.s32.totalorder %s21, 0
    %s23 = scalar_select %p22, %s21, 0
    %s24 = smul.u32 8, %s23
    %s25 = ssub.s32 1, %s24
    %s26 = smul.u32 64, %s25
    %s27 = smul.u32 %s26, 4
  $region5: #{_unnamed_function_.1} parent=0 // pred_fallthru
    _
  // Predicated region
  $region6: #{_unnamed_function_.1} parent=0 // pred_check
    _
  $region7: #{_unnamed_function_.1} parent=0 // pred_check_branch
    %29 = sbr.rel (0) target = $region9
  $region8: #{_unnamed_function_.1} parent=0 // pred_region
    %s30 = sadd.s32 0, 0
    %p31 = scmp.lt.s32.totalorder %s30, 0
    %s32 = scalar_select %p31, %s30, 0
    %s33 = smul.u32 8, %s32
    %s34 = ssub.s32 1, %s33
    %s35 = smul.u32 64, %s34
    %s36 = smul.u32 %s35, 4
    %p37 = scmp.lt.s32.totalorder %s33, 0
    %s38 = scalar_select %p37, %s33, 0
    %s39 = smul.addr %s38, 4
    %s40 = smul.addr %s39, 4
    %s41 = scalar_lea.vmem %s1, %s40
    %s42 = sadd.s32 0, 0
    %p43 = scmp.lt.s32.totalorder %s42, 0
    %s44 = scalar_select %p43, %s42, 0
    %s45 = smul.u32 8, %s44
    %s46 = ssub.s32 1, %s45
    %s47 = smul.u32 64, %s46
    %s48 = smul.u32 %s47, 4
  $region9: #{_unnamed_function_.1} parent=0 // pred_fallthru
    _
  %s49 = sadd.s32 0, 0
  %p50 = scmp.lt.s32.totalorder %s49, 0
  %s51 = scalar_select %p50, %s49, 0
  %s52 = smul.u32 8, %s51
  %s53 = ssub.s32 1, %s52
  %s54 = smul.u32 64, %s53
  %s55 = smul.u32 %s54, 4
  %p56 = scmp.lt.s32.totalorder %s52, 0
  %s57 = scalar_select %p56, %s52, 0
  %s58 = smul.addr %s57, 4
  %s59 = smul.addr %s58, 4
  %s60 = scalar_lea.vmem %s0, %s59
  %s61 = sadd.s32 0, 0
  %p62 = scmp.lt.s32.totalorder %s61, 0
  %s63 = scalar_select %p62, %s61, 0
  %s64 = smul.u32 8, %s63
  %s65 = ssub.s32 1, %s64
  %s66 = smul.u32 64, %s65
  %s67 = smul.u32 %s66, 4
  %p68 = scmp.lt.s32.totalorder %s64, 0
  %s69 = scalar_select %p68, %s64, 0
  %s70 = smul.addr %s69, 4
  %s71 = smul.addr %s70, 4
  %s72 = scalar_lea.vmem %s1, %s71
  %s73 = sadd.s32 0, 0
  %p74 = scmp.lt.s32.totalorder %s73, 0
  %s75 = scalar_select %p74, %s73, 0
  %s76 = smul.u32 8, %s75
  %s77 = ssub.s32 1, %s76
  %s78 = smul.u32 64, %s77
  %s79 = smul.u32 %s78, 4
  %p80 = scmp.lt.s32.totalorder %s76, 0
  %s81 = scalar_select %p80, %s76, 0
  %s82 = smul.addr %s81, 4
  %s83 = smul.addr %s82, 4
  %s84 = scalar_lea.vmem %s0, %s83
  %s85 = sadd.s32 0, 0
  %p86 = scmp.lt.s32.totalorder %s85, 0
  %s87 = scalar_select %p86, %s85, 0
  %s88 = smul.u32 8, %s87
  %s89 = ssub.s32 1, %s88
  %s90 = smul.u32 64, %s89
  %s91 = smul.u32 %s90, 4
  %s92 = sadd.s32 0, 0
  %p93 = scmp.lt.s32.totalorder %s92, 0
  %s94 = scalar_select %p93, %s92, 0
  %s95 = smul.u32 8, %s94
  %s96 = ssub.s32 1, %s95
  %s97 = smul.u32 64, %s96
  %s98 = smul.u32 %s97, 4
  %p99 = scmp.lt.s32.totalorder %s95, 0
  %s100 = scalar_select %p99, %s95, 0
  %s101 = smul.addr %s100, 4
  %s102 = smul.addr %s101, 4
  %s103 = scalar_lea.vmem %s1, %s102
  %s104 = sadd.s32 0, 0
  %p105 = scmp.lt.s32.totalorder %s104, 0
  %s106 = scalar_select %p105, %s104, 0
  %s107 = smul.u32 8, %s106
  %s108 = ssub.s32 1, %s107
  %s109 = smul.u32 64, %s108
  %s110 = smul.u32 %s109, 4
  %p111 = scmp.eq.s32.totalorder 0, 0
  // Predicated region
  $region10: #{_unnamed_function_.1} parent=0 // pred_check
    %p112 = pneg %p111
  $region11: #{_unnamed_function_.1} parent=0 // pred_check_branch
    %114 = sbr.rel (%p112) target = $region13
  $region12: #{_unnamed_function_.1} parent=0 // pred_region
    %v115 = vlaneseq
    %vm116 = vcmp.ge.s32.totalorder %v115, 0
    %vm117 = vcmp.lt.s32.totalorder %v115, 512
    %vm118 = vmand %vm116, %vm117
    %119 = vst.msk [vmem:[#allocation2] sm:$0xf] %vm118, 0.0
    %120 = vst.msk [vmem:[#allocation3] sm:$0xf] %vm118, 0.0
    %121 = vst.msk [vmem:[#allocation4] sm:$0xf] %vm118, 0.0
  $region13: #{_unnamed_function_.1} parent=0 // pred_fallthru
    _
  %v122 = vld [vmem:[%s84] sm:$0xff]
  %v123 = vld [vmem:[%s84 + $0x8] sm:$0xff]
  %v124 = vld [vmem:[%s84 + $0x10] sm:$0xff]
  %v125 = vld [vmem:[%s84 + $0x18] sm:$0xff]
  %v126 = vld [vmem:[%s84 + $0x20] sm:$0xff]
  %v127 = vld [vmem:[%s84 + $0x28] sm:$0xff]
  %v128 = vld [vmem:[%s84 + $0x30] sm:$0xff]
  %v129 = vld [vmem:[%s84 + $0x38] sm:$0xff]
  %v130 = vld [vmem:[%s84 + $0x40] sm:$0xff]
  %v131 = vld [vmem:[%s84 + $0x48] sm:$0xff]
  %v132 = vld [vmem:[%s84 + $0x50] sm:$0xff]
  %v133 = vld [vmem:[%s84 + $0x58] sm:$0xff]
  %v134 = vld [vmem:[%s84 + $0x60] sm:$0xff]
  %v135 = vld [vmem:[%s84 + $0x68] sm:$0xff]
  %v136 = vld [vmem:[%s84 + $0x70] sm:$0xff]
  %v137 = vld [vmem:[%s84 + $0x78] sm:$0xff]
  %vm138 = vcmp.lt.f32.partialorder %v122, 0.5
  %vm139 = vcmp.lt.f32.partialorder %v123, 0.5
  %vm140 = vcmp.lt.f32.partialorder %v124, 0.5
  %vm141 = vcmp.lt.f32.partialorder %v125, 0.5
  %vm142 = vcmp.lt.f32.partialorder %v126, 0.5
  %vm143 = vcmp.lt.f32.partialorder %v127, 0.5
  %vm144 = vcmp.lt.f32.partialorder %v128, 0.5
  %vm145 = vcmp.lt.f32.partialorder %v129, 0.5
  %vm146 = vcmp.lt.f32.partialorder %v130, 0.5
  %vm147 = vcmp.lt.f32.partialorder %v131, 0.5
  %vm148 = vcmp.lt.f32.partialorder %v132, 0.5
  %vm149 = vcmp.lt.f32.partialorder %v133, 0.5
  %vm150 = vcmp.lt.f32.partialorder %v134, 0.5
  %vm151 = vcmp.lt.f32.partialorder %v135, 0.5
  %vm152 = vcmp.lt.f32.partialorder %v136, 0.5
  %vm153 = vcmp.lt.f32.partialorder %v137, 0.5
  %v154 = vld [vmem:[%s103] sm:$0xff]
  %v155 = vld [vmem:[%s103 + $0x8] sm:$0xff]
  %v156 = vld [vmem:[%s103 + $0x10] sm:$0xff]
  %v157 = vld [vmem:[%s103 + $0x18] sm:$0xff]
  %v158 = vld [vmem:[%s103 + $0x20] sm:$0xff]
  %v159 = vld [vmem:[%s103 + $0x28] sm:$0xff]
  %v160 = vld [vmem:[%s103 + $0x30] sm:$0xff]
  %v161 = vld [vmem:[%s103 + $0x38] sm:$0xff]
  %v162 = vld [vmem:[%s103 + $0x40] sm:$0xff]
  %v163 = vld [vmem:[%s103 + $0x48] sm:$0xff]
  %v164 = vld [vmem:[%s103 + $0x50] sm:$0xff]
  %v165 = vld [vmem:[%s103 + $0x58] sm:$0xff]
  %v166 = vld [vmem:[%s103 + $0x60] sm:$0xff]
  %v167 = vld [vmem:[%s103 + $0x68] sm:$0xff]
  %v168 = vld [vmem:[%s103 + $0x70] sm:$0xff]
  %v169 = vld [vmem:[%s103 + $0x78] sm:$0xff]
  %s170 = sadd.s32 0, 0
  %s171 = smul.u32 %s170, 16384
  %s172 = sadd.s32 %s171, 16384
  %p173 = scmp.le.s32.totalorder %s172, 2048
  // Predicated region
  $region14: #{_unnamed_function_.1} parent=0 // pred_check
    %p174 = pneg %p173
  $region15: #{_unnamed_function_.1} parent=0 // pred_check_branch
    %176 = sbr.rel (%p174) target = $region17
  $region16: #{_unnamed_function_.1} parent=0 // pred_region
    %v177 = vsel %vm138, 0.0, %v154
    %v178 = vsel %vm139, 0.0, %v155
    %v179 = vsel %vm140, 0.0, %v156
    %v180 = vsel %vm141, 0.0, %v157
    %v181 = vsel %vm142, 0.0, %v158
    %v182 = vsel %vm143, 0.0, %v159
    %v183 = vsel %vm144, 0.0, %v160
    %v184 = vsel %vm145, 0.0, %v161
    %v185 = vsel %vm146, 0.0, %v162
    %v186 = vsel %vm147, 0.0, %v163
    %v187 = vsel %vm148, 0.0, %v164
    %v188 = vsel %vm149, 0.0, %v165
    %v189 = vsel %vm150, 0.0, %v166
    %v190 = vsel %vm151, 0.0, %v167
    %v191 = vsel %vm152, 0.0, %v168
    %v192 = vsel %vm153, 0.0, %v169
    %v193 = vsel %vm138, 0.0, 1.0
    %v194 = vsel %vm139, 0.0, 1.0
    %v195 = vsel %vm140, 0.0, 1.0
    %v196 = vsel %vm141, 0.0, 1.0
    %v197 = vsel %vm142, 0.0, 1.0
    %v198 = vsel %vm143, 0.0, 1.0
    %v199 = vsel %vm144, 0.0, 1.0
    %v200 = vsel %vm145, 0.0, 1.0
    %v201 = vsel %vm146, 0.0, 1.0
    %v202 = vsel %vm147, 0.0, 1.0
    %v203 = vsel %vm148, 0.0, 1.0
    %v204 = vsel %vm149, 0.0, 1.0
    %v205 = vsel %vm150, 0.0, 1.0
    %v206 = vsel %vm151, 0.0, 1.0
    %v207 = vsel %vm152, 0.0, 1.0
    %v208 = vsel %vm153, 0.0, 1.0
    %v209 = vld [vmem:[#allocation2] sm:$0xf]
    %v226 = vcombine.low %v177, %v179
    %v227 = vcombine.high %v177, %v179
    %v228 = vcombine.low %v178, %v180
    %v229 = vcombine.high %v178, %v180
    %v230 = vcombine.low %v181, %v183
    %v231 = vcombine.high %v181, %v183
    %v232 = vcombine.low %v182, %v184
    %v233 = vcombine.high %v182, %v184
    %v234 = vcombine.low %v185, %v187
    %v235 = vcombine.high %v185, %v187
    %v236 = vcombine.low %v186, %v188
    %v237 = vcombine.high %v186, %v188
    %v238 = vcombine.low %v189, %v191
    %v239 = vcombine.high %v189, %v191
    %v240 = vcombine.low %v190, %v192
    %v241 = vcombine.high %v190, %v192
    %v258 = vadd.f32 %v226, %v230
    %v259 = vadd.f32 %v258, %v234
    %v260 = vadd.f32 %v259, %v238
    %v261 = vrot.slane %v260, 4
    %v262 = vadd.f32 %v260, %v261
    %v263 = vrot.slane %v262, 2
    %v264 = vadd.f32 %v262, %v263
    %v265 = vrot.slane %v264, 1
    %v266 = vadd.f32 %v264, %v265
    %v267 = vadd.f32 %v227, %v231
    %v268 = vadd.f32 %v267, %v235
    %v269 = vadd.f32 %v268, %v239
    %v270 = vrot.slane %v269, 4
    %v271 = vadd.f32 %v269, %v270
    %v272 = vrot.slane %v271, 2
    %v273 = vadd.f32 %v271, %v272
    %v274 = vrot.slane %v273, 1
    %v275 = vadd.f32 %v273, %v274
    %v276 = vadd.f32 %v228, %v232
    %v277 = vadd.f32 %v276, %v236
    %v278 = vadd.f32 %v277, %v240
    %v279 = vrot.slane %v278, 4
    %v280 = vadd.f32 %v278, %v279
    %v281 = vrot.slane %v280, 2
    %v282 = vadd.f32 %v280, %v281
    %v283 = vrot.slane %v282, 1
    %v284 = vadd.f32 %v282, %v283
    %v285 = vadd.f32 %v229, %v233
    %v286 = vadd.f32 %v285, %v237
    %v287 = vadd.f32 %v286, %v241
    %v288 = vrot.slane %v287, 4
    %v289 = vadd.f32 %v287, %v288
    %v290 = vrot.slane %v289, 2
    %v291 = vadd.f32 %v289, %v290
    %v292 = vrot.slane %v291, 1
    %v293 = vadd.f32 %v291, %v292
    %v298 = vcombine.low %v266, %v275
    %v299 = vcombine.low %v284, %v293
    %v301 = vunpack.c.l.s4 1966171168
    %v302 = vunpack.c.0.s8 %v301
    %v303 = vlaneseq
    %v304 = vshrl.u32 %v303, 7
    %v305 = vsub.s32 %v302, %v304
    %v306 = vrot.slane %v298, %v305
    %v308 = vunpack.c.l.s4 1966171168
    %v309 = vunpack.c.0.s8 %v308
    %v310 = vlaneseq
    %v311 = vshrl.u32 %v310, 7
    %v312 = vsub.s32 %v309, %v311
    %v313 = vrot.slane %v299, %v312
    %v314 = vcombine.low %v306, %v313
    %v316 = vunpack.c.l.s4 1966171168
    %v317 = vunpack.c.0.s8 %v316
    %v318 = vlaneseq
    %v319 = vshrl.u32 %v318, 7
    %v320 = vsub.s32 %v317, %v319
    %v321 = vrot.slane %v314, %v320
    %v323 = vadd.f32 %v209, %v321
    %v324 = vlaneseq
    %vm325 = vcmp.ge.s32.totalorder %v324, 0
    %vm326 = vcmp.lt.s32.totalorder %v324, 512
    %vm327 = vmand %vm325, %vm326
    %328 = vst.msk [vmem:[#allocation2] sm:$0xf] %vm327, %v323
    %v329 = vld [vmem:[#allocation3] sm:$0xf]
    %v346 = vcombine.low %v193, %v195
    %v347 = vcombine.high %v193, %v195
    %v348 = vcombine.low %v194, %v196
    %v349 = vcombine.high %v194, %v196
    %v350 = vcombine.low %v197, %v199
    %v351 = vcombine.high %v197, %v199
    %v352 = vcombine.low %v198, %v200
    %v353 = vcombine.high %v198, %v200
    %v354 = vcombine.low %v201, %v203
    %v355 = vcombine.high %v201, %v203
    %v356 = vcombine.low %v202, %v204
    %v357 = vcombine.high %v202, %v204
    %v358 = vcombine.low %v205, %v207
    %v359 = vcombine.high %v205, %v207
    %v360 = vcombine.low %v206, %v208
    %v361 = vcombine.high %v206, %v208
    %v378 = vadd.f32 %v346, %v350
    %v379 = vadd.f32 %v378, %v354
    %v380 = vadd.f32 %v379, %v358
    %v381 = vrot.slane %v380, 4
    %v382 = vadd.f32 %v380, %v381
    %v383 = vrot.slane %v382, 2
    %v384 = vadd.f32 %v382, %v383
    %v385 = vrot.slane %v384, 1
    %v386 = vadd.f32 %v384, %v385
    %v387 = vadd.f32 %v347, %v351
    %v388 = vadd.f32 %v387, %v355
    %v389 = vadd.f32 %v388, %v359
    %v390 = vrot.slane %v389, 4
    %v391 = vadd.f32 %v389, %v390
    %v392 = vrot.slane %v391, 2
    %v393 = vadd.f32 %v391, %v392
    %v394 = vrot.slane %v393, 1
    %v395 = vadd.f32 %v393, %v394
    %v396 = vadd.f32 %v348, %v352
    %v397 = vadd.f32 %v396, %v356
    %v398 = vadd.f32 %v397, %v360
    %v399 = vrot.slane %v398, 4
    %v400 = vadd.f32 %v398, %v399
    %v401 = vrot.slane %v400, 2
    %v402 = vadd.f32 %v400, %v401
    %v403 = vrot.slane %v402, 1
    %v404 = vadd.f32 %v402, %v403
    %v405 = vadd.f32 %v349, %v353
    %v406 = vadd.f32 %v405, %v357
    %v407 = vadd.f32 %v406, %v361
    %v408 = vrot.slane %v407, 4
    %v409 = vadd.f32 %v407, %v408
    %v410 = vrot.slane %v409, 2
    %v411 = vadd.f32 %v409, %v410
    %v412 = vrot.slane %v411, 1
    %v413 = vadd.f32 %v411, %v412
    %v418 = vcombine.low %v386, %v395
    %v419 = vcombine.low %v404, %v413
    %v421 = vunpack.c.l.s4 1966171168
    %v422 = vunpack.c.0.s8 %v421
    %v423 = vlaneseq
    %v424 = vshrl.u32 %v423, 7
    %v425 = vsub.s32 %v422, %v424
    %v426 = vrot.slane %v418, %v425
    %v428 = vunpack.c.l.s4 1966171168
    %v429 = vunpack.c.0.s8 %v428
    %v430 = vlaneseq
    %v431 = vshrl.u32 %v430, 7
    %v432 = vsub.s32 %v429, %v431
    %v433 = vrot.slane %v419, %v432
    %v434 = vcombine.low %v426, %v433
    %v436 = vunpack.c.l.s4 1966171168
    %v437 = vunpack.c.0.s8 %v436
    %v438 = vlaneseq
    %v439 = vshrl.u32 %v438, 7
    %v440 = vsub.s32 %v437, %v439
    %v441 = vrot.slane %v434, %v440
    %v443 = vadd.f32 %v329, %v441
    %444 = vst.msk [vmem:[#allocation3] sm:$0xf] %vm327, %v443
    %v445 = vld [vmem:[#allocation4] sm:$0xf]
    %v462 = vcombine.low %v154, %v156
    %v463 = vcombine.high %v154, %v156
    %v464 = vcombine.low %v155, %v157
    %v465 = vcombine.high %v155, %v157
    %v466 = vcombine.low %v158, %v160
    %v467 = vcombine.high %v158, %v160
    %v468 = vcombine.low %v159, %v161
    %v469 = vcombine.high %v159, %v161
    %v470 = vcombine.low %v162, %v164
    %v471 = vcombine.high %v162, %v164
    %v472 = vcombine.low %v163, %v165
    %v473 = vcombine.high %v163, %v165
    %v474 = vcombine.low %v166, %v168
    %v475 = vcombine.high %v166, %v168
    %v476 = vcombine.low %v167, %v169
    %v477 = vcombine.high %v167, %v169
    %v494 = vadd.f32 %v462, %v466
    %v495 = vadd.f32 %v494, %v470
    %v496 = vadd.f32 %v495, %v474
    %v497 = vrot.slane %v496, 4
    %v498 = vadd.f32 %v496, %v497
    %v499 = vrot.slane %v498, 2
    %v500 = vadd.f32 %v498, %v499
    %v501 = vrot.slane %v500, 1
    %v502 = vadd.f32 %v500, %v501
    %v503 = vadd.f32 %v463, %v467
    %v504 = vadd.f32 %v503, %v471
    %v505 = vadd.f32 %v504, %v475
    %v506 = vrot.slane %v505, 4
    %v507 = vadd.f32 %v505, %v506
    %v508 = vrot.slane %v507, 2
    %v509 = vadd.f32 %v507, %v508
    %v510 = vrot.slane %v509, 1
    %v511 = vadd.f32 %v509, %v510
    %v512 = vadd.f32 %v464, %v468
    %v513 = vadd.f32 %v512, %v472
    %v514 = vadd.f32 %v513, %v476
    %v515 = vrot.slane %v514, 4
    %v516 = vadd.f32 %v514, %v515
    %v517 = vrot.slane %v516, 2
    %v518 = vadd.f32 %v516, %v517
    %v519 = vrot.slane %v518, 1
    %v520 = vadd.f32 %v518, %v519
    %v521 = vadd.f32 %v465, %v469
    %v522 = vadd.f32 %v521, %v473
    %v523 = vadd.f32 %v522, %v477
    %v524 = vrot.slane %v523, 4
    %v525 = vadd.f32 %v523, %v524
    %v526 = vrot.slane %v525, 2
    %v527 = vadd.f32 %v525, %v526
    %v528 = vrot.slane %v527, 1
    %v529 = vadd.f32 %v527, %v528
    %v534 = vcombine.low %v502, %v511
    %v535 = vcombine.low %v520, %v529
    %v537 = vunpack.c.l.s4 1966171168
    %v538 = vunpack.c.0.s8 %v537
    %v539 = vlaneseq
    %v540 = vshrl.u32 %v539, 7
    %v541 = vsub.s32 %v538, %v540
    %v542 = vrot.slane %v534, %v541
    %v544 = vunpack.c.l.s4 1966171168
    %v545 = vunpack.c.0.s8 %v544
    %v546 = vlaneseq
    %v547 = vshrl.u32 %v546, 7
    %v548 = vsub.s32 %v545, %v547
    %v549 = vrot.slane %v535, %v548
    %v550 = vcombine.low %v542, %v549
    %v552 = vunpack.c.l.s4 1966171168
    %v553 = vunpack.c.0.s8 %v552
    %v554 = vlaneseq
    %v555 = vshrl.u32 %v554, 7
    %v556 = vsub.s32 %v553, %v555
    %v557 = vrot.slane %v550, %v556
    %v559 = vadd.f32 %v445, %v557
    %560 = vst.msk [vmem:[#allocation4] sm:$0xf] %vm327, %v559
  $region17: #{_unnamed_function_.1} parent=0 // pred_fallthru
    _
  %p561 = scmp.gt.s32.totalorder %s172, 2048
  // Predicated region
  $region18: #{_unnamed_function_.1} parent=0 // pred_check
    %p562 = pneg %p561
  $region19: #{_unnamed_function_.1} parent=0 // pred_check_branch
    %564 = sbr.rel (%p562) target = $region21
  $region20: #{_unnamed_function_.1} parent=0 // pred_region
    %v565 = vlaneseq
    %v566 = vshrl.u32 %v565, 7
    %v567 = vadd.s32 %v566, 8
    %v568 = vadd.s32 %v566, 16
    %v569 = vadd.s32 %v566, 24
    %v570 = vlaneseq
    %v571 = vand.u32 %v570, 127
    %v572 = vadd.s32 %v571, 128
    %v573 = vadd.s32 %v571, 256
    %v574 = vadd.s32 %v571, 384
    %v575 = vmul.u32 %v566, 512
    %v576 = vmul.u32 %v567, 512
    %v577 = vmul.u32 %v568, 512
    %v578 = vmul.u32 %v569, 512
    %v579 = vstv %s171
    %v580 = vadd.s32 %v579, %v575
    %v581 = vadd.s32 %v579, %v576
    %v582 = vadd.s32 %v579, %v577
    %v583 = vadd.s32 %v579, %v578
    %v584 = vadd.s32 %v580, %v571
    %v585 = vadd.s32 %v580, %v572
    %v586 = vadd.s32 %v580, %v573
    %v587 = vadd.s32 %v580, %v574
    %v588 = vadd.s32 %v581, %v571
    %v589 = vadd.s32 %v581, %v572
    %v590 = vadd.s32 %v581, %v573
    %v591 = vadd.s32 %v581, %v574
    %v592 = vadd.s32 %v582, %v571
    %v593 = vadd.s32 %v582, %v572
    %v594 = vadd.s32 %v582, %v573
    %v595 = vadd.s32 %v582, %v574
    %v596 = vadd.s32 %v583, %v571
    %v597 = vadd.s32 %v583, %v572
    %v598 = vadd.s32 %v583, %v573
    %v599 = vadd.s32 %v583, %v574
    %vm600 = vcmp.lt.s32.totalorder %v584, 2048
    %vm601 = vcmp.lt.s32.totalorder %v585, 2048
    %vm602 = vcmp.lt.s32.totalorder %v586, 2048
    %vm603 = vcmp.lt.s32.totalorder %v587, 2048
    %vm604 = vcmp.lt.s32.totalorder %v588, 2048
    %vm605 = vcmp.lt.s32.totalorder %v589, 2048
    %vm606 = vcmp.lt.s32.totalorder %v590, 2048
    %vm607 = vcmp.lt.s32.totalorder %v591, 2048
    %vm608 = vcmp.lt.s32.totalorder %v592, 2048
    %vm609 = vcmp.lt.s32.totalorder %v593, 2048
    %vm610 = vcmp.lt.s32.totalorder %v594, 2048
    %vm611 = vcmp.lt.s32.totalorder %v595, 2048
    %vm612 = vcmp.lt.s32.totalorder %v596, 2048
    %vm613 = vcmp.lt.s32.totalorder %v597, 2048
    %vm614 = vcmp.lt.s32.totalorder %v598, 2048
    %vm615 = vcmp.lt.s32.totalorder %v599, 2048
    %v632 = vcombine.low %v154, %v156
    %v633 = vcombine.high %v154, %v156
    %v634 = vcombine.low %v155, %v157
    %v635 = vcombine.high %v155, %v157
    %v636 = vcombine.low %v158, %v160
    %v637 = vcombine.high %v158, %v160
    %v638 = vcombine.low %v159, %v161
    %v639 = vcombine.high %v159, %v161
    %v640 = vcombine.low %v162, %v164
    %v641 = vcombine.high %v162, %v164
    %v642 = vcombine.low %v163, %v165
    %v643 = vcombine.high %v163, %v165
    %v644 = vcombine.low %v166, %v168
    %v645 = vcombine.high %v166, %v168
    %v646 = vcombine.low %v167, %v169
    %v647 = vcombine.high %v167, %v169
    %v664 = vsel %vm600, %v632, 0.0
    %v665 = vsel %vm601, %v633, 0.0
    %v666 = vsel %vm602, %v634, 0.0
    %v667 = vsel %vm603, %v635, 0.0
    %v668 = vsel %vm604, %v636, 0.0
    %v669 = vsel %vm605, %v637, 0.0
    %v670 = vsel %vm606, %v638, 0.0
    %v671 = vsel %vm607, %v639, 0.0
    %v672 = vsel %vm608, %v640, 0.0
    %v673 = vsel %vm609, %v641, 0.0
    %v674 = vsel %vm610, %v642, 0.0
    %v675 = vsel %vm611, %v643, 0.0
    %v676 = vsel %vm612, %v644, 0.0
    %v677 = vsel %vm613, %v645, 0.0
    %v678 = vsel %vm614, %v646, 0.0
    %v679 = vsel %vm615, %v647, 0.0
    %v680 = vsel %vm600, 1.0, 0.0
    %v681 = vsel %vm601, 1.0, 0.0
    %v682 = vsel %vm602, 1.0, 0.0
    %v683 = vsel %vm603, 1.0, 0.0
    %v684 = vsel %vm604, 1.0, 0.0
    %v685 = vsel %vm605, 1.0, 0.0
    %v686 = vsel %vm606, 1.0, 0.0
    %v687 = vsel %vm607, 1.0, 0.0
    %v688 = vsel %vm608, 1.0, 0.0
    %v689 = vsel %vm609, 1.0, 0.0
    %v690 = vsel %vm610, 1.0, 0.0
    %v691 = vsel %vm611, 1.0, 0.0
    %v692 = vsel %vm612, 1.0, 0.0
    %v693 = vsel %vm613, 1.0, 0.0
    %v694 = vsel %vm614, 1.0, 0.0
    %v695 = vsel %vm615, 1.0, 0.0
    %v712 = vcombine.low %v664, %v665
    %v713 = vcombine.high %v664, %v665
    %v714 = vcombine.low %v666, %v667
    %v715 = vcombine.high %v666, %v667
    %v716 = vcombine.low %v668, %v669
    %v717 = vcombine.high %v668, %v669
    %v718 = vcombine.low %v670, %v671
    %v719 = vcombine.high %v670, %v671
    %v720 = vcombine.low %v672, %v673
    %v721 = vcombine.high %v672, %v673
    %v722 = vcombine.low %v674, %v675
    %v723 = vcombine.high %v674, %v675
    %v724 = vcombine.low %v676, %v677
    %v725 = vcombine.high %v676, %v677
    %v726 = vcombine.low %v678, %v679
    %v727 = vcombine.high %v678, %v679
    %v744 = vsel %vm138, 0.0, %v712
    %v745 = vsel %vm139, 0.0, %v714
    %v746 = vsel %vm140, 0.0, %v713
    %v747 = vsel %vm141, 0.0, %v715
    %v748 = vsel %vm142, 0.0, %v716
    %v749 = vsel %vm143, 0.0, %v718
    %v750 = vsel %vm144, 0.0, %v717
    %v751 = vsel %vm145, 0.0, %v719
    %v752 = vsel %vm146, 0.0, %v720
    %v753 = vsel %vm147, 0.0, %v722
    %v754 = vsel %vm148, 0.0, %v721
    %v755 = vsel %vm149, 0.0, %v723
    %v756 = vsel %vm150, 0.0, %v724
    %v757 = vsel %vm151, 0.0, %v726
    %v758 = vsel %vm152, 0.0, %v725
    %v759 = vsel %vm153, 0.0, %v727
    %v776 = vcombine.low %v680, %v681
    %v777 = vcombine.high %v680, %v681
    %v778 = vcombine.low %v682, %v683
    %v779 = vcombine.high %v682, %v683
    %v780 = vcombine.low %v684, %v685
    %v781 = vcombine.high %v684, %v685
    %v782 = vcombine.low %v686, %v687
    %v783 = vcombine.high %v686, %v687
    %v784 = vcombine.low %v688, %v689
    %v785 = vcombine.high %v688, %v689
    %v786 = vcombine.low %v690, %v691
    %v787 = vcombine.high %v690, %v691
    %v788 = vcombine.low %v692, %v693
    %v789 = vcombine.high %v692, %v693
    %v790 = vcombine.low %v694, %v695
    %v791 = vcombine.high %v694, %v695
    %v808 = vsel %vm138, 0.0, %v776
    %v809 = vsel %vm139, 0.0, %v778
    %v810 = vsel %vm140, 0.0, %v777
    %v811 = vsel %vm141, 0.0, %v779
    %v812 = vsel %vm142, 0.0, %v780
    %v813 = vsel %vm143, 0.0, %v782
    %v814 = vsel %vm144, 0.0, %v781
    %v815 = vsel %vm145, 0.0, %v783
    %v816 = vsel %vm146, 0.0, %v784
    %v817 = vsel %vm147, 0.0, %v786
    %v818 = vsel %vm148, 0.0, %v785
    %v819 = vsel %vm149, 0.0, %v787
    %v820 = vsel %vm150, 0.0, %v788
    %v821 = vsel %vm151, 0.0, %v790
    %v822 = vsel %vm152, 0.0, %v789
    %v823 = vsel %vm153, 0.0, %v791
    %v824 = vld [vmem:[#allocation2] sm:$0xf]
    %v841 = vcombine.low %v744, %v746
    %v842 = vcombine.high %v744, %v746
    %v843 = vcombine.low %v745, %v747
    %v844 = vcombine.high %v745, %v747
    %v845 = vcombine.low %v748, %v750
    %v846 = vcombine.high %v748, %v750
    %v847 = vcombine.low %v749, %v751
    %v848 = vcombine.high %v749, %v751
    %v849 = vcombine.low %v752, %v754
    %v850 = vcombine.high %v752, %v754
    %v851 = vcombine.low %v753, %v755
    %v852 = vcombine.high %v753, %v755
    %v853 = vcombine.low %v756, %v758
    %v854 = vcombine.high %v756, %v758
    %v855 = vcombine.low %v757, %v759
    %v856 = vcombine.high %v757, %v759
    %v873 = vadd.f32 %v841, %v845
    %v874 = vadd.f32 %v873, %v849
    %v875 = vadd.f32 %v874, %v853
    %v876 = vrot.slane %v875, 4
    %v877 = vadd.f32 %v875, %v876
    %v878 = vrot.slane %v877, 2
    %v879 = vadd.f32 %v877, %v878
    %v880 = vrot.slane %v879, 1
    %v881 = vadd.f32 %v879, %v880
    %v882 = vadd.f32 %v842, %v846
    %v883 = vadd.f32 %v882, %v850
    %v884 = vadd.f32 %v883, %v854
    %v885 = vrot.slane %v884, 4
    %v886 = vadd.f32 %v884, %v885
    %v887 = vrot.slane %v886, 2
    %v888 = vadd.f32 %v886, %v887
    %v889 = vrot.slane %v888, 1
    %v890 = vadd.f32 %v888, %v889
    %v891 = vadd.f32 %v843, %v847
    %v892 = vadd.f32 %v891, %v851
    %v893 = vadd.f32 %v892, %v855
    %v894 = vrot.slane %v893, 4
    %v895 = vadd.f32 %v893, %v894
    %v896 = vrot.slane %v895, 2
    %v897 = vadd.f32 %v895, %v896
    %v898 = vrot.slane %v897, 1
    %v899 = vadd.f32 %v897, %v898
    %v900 = vadd.f32 %v844, %v848
    %v901 = vadd.f32 %v900, %v852
    %v902 = vadd.f32 %v901, %v856
    %v903 = vrot.slane %v902, 4
    %v904 = vadd.f32 %v902, %v903
    %v905 = vrot.slane %v904, 2
    %v906 = vadd.f32 %v904, %v905
    %v907 = vrot.slane %v906, 1
    %v908 = vadd.f32 %v906, %v907
    %v913 = vcombine.low %v881, %v890
    %v914 = vcombine.low %v899, %v908
    %v916 = vunpack.c.l.s4 1966171168
    %v917 = vunpack.c.0.s8 %v916
    %v918 = vlaneseq
    %v919 = vshrl.u32 %v918, 7
    %v920 = vsub.s32 %v917, %v919
    %v921 = vrot.slane %v913, %v920
    %v923 = vunpack.c.l.s4 1966171168
    %v924 = vunpack.c.0.s8 %v923
    %v925 = vlaneseq
    %v926 = vshrl.u32 %v925, 7
    %v927 = vsub.s32 %v924, %v926
    %v928 = vrot.slane %v914, %v927
    %v929 = vcombine.low %v921, %v928
    %v931 = vunpack.c.l.s4 1966171168
    %v932 = vunpack.c.0.s8 %v931
    %v933 = vlaneseq
    %v934 = vshrl.u32 %v933, 7
    %v935 = vsub.s32 %v932, %v934
    %v936 = vrot.slane %v929, %v935
    %v938 = vadd.f32 %v824, %v936
    %v939 = vlaneseq
    %vm940 = vcmp.ge.s32.totalorder %v939, 0
    %vm941 = vcmp.lt.s32.totalorder %v939, 512
    %vm942 = vmand %vm940, %vm941
    %943 = vst.msk [vmem:[#allocation2] sm:$0xf] %vm942, %v938
    %v944 = vld [vmem:[#allocation3] sm:$0xf]
    %v961 = vcombine.low %v808, %v810
    %v962 = vcombine.high %v808, %v810
    %v963 = vcombine.low %v809, %v811
    %v964 = vcombine.high %v809, %v811
    %v965 = vcombine.low %v812, %v814
    %v966 = vcombine.high %v812, %v814
    %v967 = vcombine.low %v813, %v815
    %v968 = vcombine.high %v813, %v815
    %v969 = vcombine.low %v816, %v818
    %v970 = vcombine.high %v816, %v818
    %v971 = vcombine.low %v817, %v819
    %v972 = vcombine.high %v817, %v819
    %v973 = vcombine.low %v820, %v822
    %v974 = vcombine.high %v820, %v822
    %v975 = vcombine.low %v821, %v823
    %v976 = vcombine.high %v821, %v823
    %v993 = vadd.f32 %v961, %v965
    %v994 = vadd.f32 %v993, %v969
    %v995 = vadd.f32 %v994, %v973
    %v996 = vrot.slane %v995, 4
    %v997 = vadd.f32 %v995, %v996
    %v998 = vrot.slane %v997, 2
    %v999 = vadd.f32 %v997, %v998
    %v1000 = vrot.slane %v999, 1
    %v1001 = vadd.f32 %v999, %v1000
    %v1002 = vadd.f32 %v962, %v966
    %v1003 = vadd.f32 %v1002, %v970
    %v1004 = vadd.f32 %v1003, %v974
    %v1005 = vrot.slane %v1004, 4
    %v1006 = vadd.f32 %v1004, %v1005
    %v1007 = vrot.slane %v1006, 2
    %v1008 = vadd.f32 %v1006, %v1007
    %v1009 = vrot.slane %v1008, 1
    %v1010 = vadd.f32 %v1008, %v1009
    %v1011 = vadd.f32 %v963, %v967
    %v1012 = vadd.f32 %v1011, %v971
    %v1013 = vadd.f32 %v1012, %v975
    %v1014 = vrot.slane %v1013, 4
    %v1015 = vadd.f32 %v1013, %v1014
    %v1016 = vrot.slane %v1015, 2
    %v1017 = vadd.f32 %v1015, %v1016
    %v1018 = vrot.slane %v1017, 1
    %v1019 = vadd.f32 %v1017, %v1018
    %v1020 = vadd.f32 %v964, %v968
    %v1021 = vadd.f32 %v1020, %v972
    %v1022 = vadd.f32 %v1021, %v976
    %v1023 = vrot.slane %v1022, 4
    %v1024 = vadd.f32 %v1022, %v1023
    %v1025 = vrot.slane %v1024, 2
    %v1026 = vadd.f32 %v1024, %v1025
    %v1027 = vrot.slane %v1026, 1
    %v1028 = vadd.f32 %v1026, %v1027
    %v1033 = vcombine.low %v1001, %v1010
    %v1034 = vcombine.low %v1019, %v1028
    %v1036 = vunpack.c.l.s4 1966171168
    %v1037 = vunpack.c.0.s8 %v1036
    %v1038 = vlaneseq
    %v1039 = vshrl.u32 %v1038, 7
    %v1040 = vsub.s32 %v1037, %v1039
    %v1041 = vrot.slane %v1033, %v1040
    %v1043 = vunpack.c.l.s4 1966171168
    %v1044 = vunpack.c.0.s8 %v1043
    %v1045 = vlaneseq
    %v1046 = vshrl.u32 %v1045, 7
    %v1047 = vsub.s32 %v1044, %v1046
    %v1048 = vrot.slane %v1034, %v1047
    %v1049 = vcombine.low %v1041, %v1048
    %v1051 = vunpack.c.l.s4 1966171168
    %v1052 = vunpack.c.0.s8 %v1051
    %v1053 = vlaneseq
    %v1054 = vshrl.u32 %v1053, 7
    %v1055 = vsub.s32 %v1052, %v1054
    %v1056 = vrot.slane %v1049, %v1055
    %v1058 = vadd.f32 %v944, %v1056
    %1059 = vst.msk [vmem:[#allocation3] sm:$0xf] %vm942, %v1058
    %v1060 = vld [vmem:[#allocation4] sm:$0xf]
    %v1061 = vadd.f32 %v664, %v668
    %v1062 = vadd.f32 %v1061, %v672
    %v1063 = vadd.f32 %v1062, %v676
    %v1064 = vrot.slane %v1063, 4
    %v1065 = vadd.f32 %v1063, %v1064
    %v1066 = vrot.slane %v1065, 2
    %v1067 = vadd.f32 %v1065, %v1066
    %v1068 = vrot.slane %v1067, 1
    %v1069 = vadd.f32 %v1067, %v1068
    %v1070 = vadd.f32 %v665, %v669
    %v1071 = vadd.f32 %v1070, %v673
    %v1072 = vadd.f32 %v1071, %v677
    %v1073 = vrot.slane %v1072, 4
    %v1074 = vadd.f32 %v1072, %v1073
    %v1075 = vrot.slane %v1074, 2
    %v1076 = vadd.f32 %v1074, %v1075
    %v1077 = vrot.slane %v1076, 1
    %v1078 = vadd.f32 %v1076, %v1077
    %v1079 = vadd.f32 %v666, %v670
    %v1080 = vadd.f32 %v1079, %v674
    %v1081 = vadd.f32 %v1080, %v678
    %v1082 = vrot.slane %v1081, 4
    %v1083 = vadd.f32 %v1081, %v1082
    %v1084 = vrot.slane %v1083, 2
    %v1085 = vadd.f32 %v1083, %v1084
    %v1086 = vrot.slane %v1085, 1
    %v1087 = vadd.f32 %v1085, %v1086
    %v1088 = vadd.f32 %v667, %v671
    %v1089 = vadd.f32 %v1088, %v675
    %v1090 = vadd.f32 %v1089, %v679
    %v1091 = vrot.slane %v1090, 4
    %v1092 = vadd.f32 %v1090, %v1091
    %v1093 = vrot.slane %v1092, 2
    %v1094 = vadd.f32 %v1092, %v1093
    %v1095 = vrot.slane %v1094, 1
    %v1096 = vadd.f32 %v1094, %v1095
    %v1101 = vcombine.low %v1069, %v1078
    %v1102 = vcombine.low %v1087, %v1096
    %v1104 = vunpack.c.l.s4 1966171168
    %v1105 = vunpack.c.0.s8 %v1104
    %v1106 = vlaneseq
    %v1107 = vshrl.u32 %v1106, 7
    %v1108 = vsub.s32 %v1105, %v1107
    %v1109 = vrot.slane %v1101, %v1108
    %v1111 = vunpack.c.l.s4 1966171168
    %v1112 = vunpack.c.0.s8 %v1111
    %v1113 = vlaneseq
    %v1114 = vshrl.u32 %v1113, 7
    %v1115 = vsub.s32 %v1112, %v1114
    %v1116 = vrot.slane %v1102, %v1115
    %v1117 = vcombine.low %v1109, %v1116
    %v1119 = vunpack.c.l.s4 1966171168
    %v1120 = vunpack.c.0.s8 %v1119
    %v1121 = vlaneseq
    %v1122 = vshrl.u32 %v1121, 7
    %v1123 = vsub.s32 %v1120, %v1122
    %v1124 = vrot.slane %v1117, %v1123
    %v1126 = vadd.f32 %v1060, %v1124
    %1127 = vst.msk [vmem:[#allocation4] sm:$0xf] %vm942, %v1126
  $region21: #{_unnamed_function_.1} parent=0 // pred_fallthru
    _
  // Predicated region
  $region22: #{_unnamed_function_.1} parent=0 // pred_check
    %p1128 = pneg %p111
  $region23: #{_unnamed_function_.1} parent=0 // pred_check_branch
    %1130 = sbr.rel (%p1128) target = $region25
  $region24: #{_unnamed_function_.1} parent=0 // pred_region
    %v1131 = vld [vmem:[#allocation2] sm:$0xf]
    %v1133 = vlaneseq
    %v1134 = vshrl.u32 %v1133, 7
    %v1135 = vsub.s32 0, %v1134
    %v1136 = vrot.slane %v1131, %v1135
    %v1137 = vlaneseq
    %v1138 = vshrl.u32 %v1137, 7
    %v1139 = vsub.s32 1, %v1138
    %v1140 = vrot.slane %v1131, %v1139
    %v1141 = vlaneseq
    %v1142 = vshrl.u32 %v1141, 7
    %v1143 = vsub.s32 2, %v1142
    %v1144 = vrot.slane %v1131, %v1143
    %v1145 = vlaneseq
    %v1146 = vshrl.u32 %v1145, 7
    %v1147 = vsub.s32 3, %v1146
    %v1148 = vrot.slane %v1131, %v1147
    %vm1153 = vcmask 1040384
    %v1154 = vsel %vm1153, %v1136, 0.0
    %v1155 = vsel %vm1153, %v1140, 0.0
    %v1156 = vadd.f32 %v1154, %v1155
    %v1157 = vsel %vm1153, %v1144, 0.0
    %v1158 = vadd.f32 %v1156, %v1157
    %v1159 = vsel %vm1153, %v1148, 0.0
    %v1160 = vadd.f32 %v1158, %v1159
    %1161 = vadd.xlane.f32.xlu0 %v1160
    %v1162 = vpop.xlane.xlu0 %1161
    %v1163 = vrot.slane %v1162, 4
    %v1164 = vadd.f32 %v1162, %v1163
    %v1165 = vrot.slane %v1164, 2
    %v1166 = vadd.f32 %v1164, %v1165
    %v1167 = vrot.slane %v1166, 1
    %v1168 = vadd.f32 %v1166, %v1167
    %s1169 = vtos %v1168
    %v1170 = vld [vmem:[#allocation3] sm:$0xf]
    %v1172 = vlaneseq
    %v1173 = vshrl.u32 %v1172, 7
    %v1174 = vsub.s32 0, %v1173
    %v1175 = vrot.slane %v1170, %v1174
    %v1176 = vlaneseq
    %v1177 = vshrl.u32 %v1176, 7
    %v1178 = vsub.s32 1, %v1177
    %v1179 = vrot.slane %v1170, %v1178
    %v1180 = vlaneseq
    %v1181 = vshrl.u32 %v1180, 7
    %v1182 = vsub.s32 2, %v1181
    %v1183 = vrot.slane %v1170, %v1182
    %v1184 = vlaneseq
    %v1185 = vshrl.u32 %v1184, 7
    %v1186 = vsub.s32 3, %v1185
    %v1187 = vrot.slane %v1170, %v1186
    %v1192 = vsel %vm1153, %v1175, 0.0
    %v1193 = vsel %vm1153, %v1179, 0.0
    %v1194 = vadd.f32 %v1192, %v1193
    %v1195 = vsel %vm1153, %v1183, 0.0
    %v1196 = vadd.f32 %v1194, %v1195
    %v1197 = vsel %vm1153, %v1187, 0.0
    %v1198 = vadd.f32 %v1196, %v1197
    %1199 = vadd.xlane.f32.xlu0 %v1198
    %v1200 = vpop.xlane.xlu0 %1199
    %v1201 = vrot.slane %v1200, 4
    %v1202 = vadd.f32 %v1200, %v1201
    %v1203 = vrot.slane %v1202, 2
    %v1204 = vadd.f32 %v1202, %v1203
    %v1205 = vrot.slane %v1204, 1
    %v1206 = vadd.f32 %v1204, %v1205
    %s1207 = vtos %v1206
    %v1208 = vld [vmem:[#allocation4] sm:$0xf]
    %v1210 = vlaneseq
    %v1211 = vshrl.u32 %v1210, 7
    %v1212 = vsub.s32 0, %v1211
    %v1213 = vrot.slane %v1208, %v1212
    %v1214 = vlaneseq
    %v1215 = vshrl.u32 %v1214, 7
    %v1216 = vsub.s32 1, %v1215
    %v1217 = vrot.slane %v1208, %v1216
    %v1218 = vlaneseq
    %v1219 = vshrl.u32 %v1218, 7
    %v1220 = vsub.s32 2, %v1219
    %v1221 = vrot.slane %v1208, %v1220
    %v1222 = vlaneseq
    %v1223 = vshrl.u32 %v1222, 7
    %v1224 = vsub.s32 3, %v1223
    %v1225 = vrot.slane %v1208, %v1224
    %v1230 = vsel %vm1153, %v1213, 0.0
    %v1231 = vsel %vm1153, %v1217, 0.0
    %v1232 = vadd.f32 %v1230, %v1231
    %v1233 = vsel %vm1153, %v1221, 0.0
    %v1234 = vadd.f32 %v1232, %v1233
    %v1235 = vsel %vm1153, %v1225, 0.0
    %v1236 = vadd.f32 %v1234, %v1235
    %1237 = vadd.xlane.f32.xlu0 %v1236
    %v1238 = vpop.xlane.xlu0 %1237
    %v1239 = vrot.slane %v1238, 4
    %v1240 = vadd.f32 %v1238, %v1239
    %v1241 = vrot.slane %v1240, 2
    %v1242 = vadd.f32 %v1240, %v1241
    %v1243 = vrot.slane %v1242, 1
    %v1244 = vadd.f32 %v1242, %v1243
    %s1245 = vtos %v1244
    %v1246 = vlaneseq
    %v1247 = vshrl.u32 %v1246, 7
    %vm1248 = vcmp.eq.s32.totalorder %v1247, 0
    %vm1249 = vcmp.eq.s32.totalorder %v1247, 1
    %vm1250 = vcmp.eq.s32.totalorder %v1247, 2
    %v1251 = vstv %s1245
    %v1252 = vsel %vm1250, %v1251, 0.0
    %v1253 = vstv %s1207
    %v1254 = vsel %vm1249, %v1253, %v1252
    %v1255 = vstv %s1169
    %v1256 = vsel %vm1248, %v1255, %v1254
    %1257 = vst [vmem:[%s2] sm:$0xff] %v1256
  $region25: #{_unnamed_function_.1} parent=0 // pred_fallthru
    _
  // Predicated region
  $region26: #{_unnamed_function_.1} parent=0 // pred_check
    _
  $region27: #{_unnamed_function_.1} parent=0 // pred_check_branch
    %1259 = sbr.rel (0) target = $region29
  $region28: #{_unnamed_function_.1} parent=0 // pred_region
    _
  $region29: #{_unnamed_function_.1} parent=0 // pred_fallthru
    _
  // Predicated region
  $region30: #{_unnamed_function_.1} parent=0 // pred_check
    _
  $region31: #{_unnamed_function_.1} parent=0 // pred_check_branch
    %1261 = sbr.rel (0) target = $region33
  $region32: #{_unnamed_function_.1} parent=0 // pred_region
    _
  $region33: #{_unnamed_function_.1} parent=0 // pred_fallthru
    _

</llo_original>
